<compile_context>
chip_gen: v5e
topology: v5e:2x2
jax: 0.10.0
libtpu: 0.0.40
codegen_flags: <defaults>
</compile_context>

<pallas_src>
import jax
import jax.numpy as jnp
from jax.experimental import pallas as pl
from jax.experimental.pallas import tpu as pltpu


def _round_up(x, m):
    return ((x + m - 1) // m) * m


def _softmax_lane(x):
    """Row softmax over last axis; approx reciprocal (EUP) + one Newton step."""
    m = jnp.max(x, axis=-1, keepdims=True)
    e = jnp.exp(x - m)
    s = jnp.sum(e, axis=-1, keepdims=True)
    r = pl.reciprocal(s, approx=True)
    r = r * (2.0 - s * r)          # Newton refinement -> ~f32 accuracy
    return e * r


def _partition_kernel(x_ref, lab_ref, w1_ref, b1_ref, w2_ref, b2_ref,
                      w3_ref, b3_ref, cep_ref, out_ref):
    """Fused 3-layer MLP + softmax and one-hot label gather + softmax."""
    x = x_ref[...]                                               # [TILE_B, feat_dim] bf16

    # bf16 MXU operands, f32 accumulation; bias/ReLU in f32.
    h1 = jnp.dot(x, w1_ref[...], preferred_element_type=jnp.float32) + b1_ref[...]
    h1 = jnp.maximum(h1, 0.0)                                    # ReLU (Dropout = identity)

    h2 = jnp.dot(h1.astype(jnp.bfloat16), w2_ref[...],
                 preferred_element_type=jnp.float32) + b2_ref[...]
    h2 = jnp.maximum(h2, 0.0)                                    # ReLU

    logits = jnp.dot(h2.astype(jnp.bfloat16), w3_ref[...],
                     preferred_element_type=jnp.float32) + b3_ref[...]
    sample = _softmax_lane(logits)                               # [TILE_B, n_env]

    # One-hot gather: class_env_probs[labels]. cep rows are padded to a sublane
    # multiple in the wrapper; padded rows are never selected (labels < n_cls).
    cep = cep_ref[...]                                           # [n_cls_pad, n_env] f32
    lab = lab_ref[...]                                           # [TILE_B, 1] int32
    n_cls_pad = cep.shape[0]
    cls_iota = jax.lax.broadcasted_iota(jnp.int32, (lab.shape[0], n_cls_pad), 1)
    one_hot = (lab == cls_iota).astype(jnp.float32)              # [TILE_B, n_cls_pad]
    gathered = jnp.dot(one_hot, cep, preferred_element_type=jnp.float32)
    cls = _softmax_lane(gathered)                                # [TILE_B, n_env]

    # Single merged output slab: [sample | class] along lanes.
    out_ref[...] = jnp.concatenate([sample, cls], axis=-1).astype(out_ref.dtype)


@jax.jit
def partition_forward(features, labels, params):
    """features: [B, feat_dim] f32, labels: [B] int.

    Returns (sample_split [B, n_env], class_split [B, n_env])."""
    w1, b1, w2, b2, w3, b3, cep = (
        params["w1"], params["b1"], params["w2"], params["b2"],
        params["w3"], params["b3"], params["class_env_probs"])

    B, feat_dim = features.shape
    h1_dim = w1.shape[1]
    h2_dim = w2.shape[1]
    n_env = w3.shape[1]
    n_cls = cep.shape[0]

    # MXU operands in bf16 (weights + streamed features); biases/table in f32.
    feats = features.astype(jnp.bfloat16)
    w1b, w2b, w3b = (w1.astype(jnp.bfloat16), w2.astype(jnp.bfloat16),
                     w3.astype(jnp.bfloat16))
    b1f, b2f, b3f = (b1.astype(jnp.float32), b2.astype(jnp.float32),
                     b3.astype(jnp.float32))

    # Pad class/env table rows to a sublane multiple for the one-hot matmul.
    n_cls_pad = _round_up(n_cls, 8)
    cep_p = jnp.pad(cep.astype(jnp.float32), ((0, n_cls_pad - n_cls), (0, 0)))

    # Batch tile: multiple of 16 (bf16 sublane pack), capped at 1024, and
    # targeting >= 2 grid steps so the "parallel" axis can use both v7x TCs.
    tile_b = max(16, min(1024, _round_up(-(-B // 2), 16)))
    num_tiles = -(-B // tile_b)
    b_pad = num_tiles * tile_b

    labs = labels.astype(jnp.int32).reshape(B, 1)
    if b_pad != B:
        feats = jnp.pad(feats, ((0, b_pad - B), (0, 0)))
        labs = jnp.pad(labs, ((0, b_pad - B), (0, 0)))

    flops = 2 * b_pad * (feat_dim * h1_dim + h1_dim * h2_dim + h2_dim * n_env
                         + n_cls_pad * n_env)
    bytes_accessed = (2 * feats.size                                   # bf16 features
                      + 4 * labs.size
                      + 2 * (w1b.size + w2b.size + w3b.size)
                      + 4 * (b1f.size + b2f.size + b3f.size + cep_p.size)
                      + 4 * b_pad * 2 * n_env)                         # merged output

    out = pl.pallas_call(
        _partition_kernel,
        out_shape=jax.ShapeDtypeStruct((b_pad, 2 * n_env), jnp.float32),
        grid=(num_tiles,),
        in_specs=[
            pl.BlockSpec((tile_b, feat_dim), lambda i: (i, 0)),   # features (tiled, bf16)
            pl.BlockSpec((tile_b, 1), lambda i: (i, 0)),          # labels   (tiled)
            pl.BlockSpec((feat_dim, h1_dim), lambda i: (0, 0)),   # w1 (resident)
            pl.BlockSpec((1, h1_dim), lambda i: (0, 0)),          # b1
            pl.BlockSpec((h1_dim, h2_dim), lambda i: (0, 0)),     # w2
            pl.BlockSpec((1, h2_dim), lambda i: (0, 0)),          # b2
            pl.BlockSpec((h2_dim, n_env), lambda i: (0, 0)),      # w3
            pl.BlockSpec((1, n_env), lambda i: (0, 0)),           # b3
            pl.BlockSpec((n_cls_pad, n_env), lambda i: (0, 0)),   # class_env_probs (padded)
        ],
        out_specs=pl.BlockSpec((tile_b, 2 * n_env), lambda i: (i, 0)),
        compiler_params=pltpu.CompilerParams(
            dimension_semantics=("parallel",)),
        cost_estimate=pl.CostEstimate(
            flops=flops,
            transcendentals=2 * b_pad * n_env,
            bytes_accessed=bytes_accessed),
    )(feats, labs, w1b, b1f, w2b, b2f, w3b, b3f, cep_p)

    sample_split = out[:B, :n_env]
    class_split = out[:B, n_env:]
    return sample_split, class_split


def init_params(key, n_cls, n_env, feat_dim):
    """Deterministic synthetic parameters. Linear weights stored as [in, out]."""
    ks = jax.random.split(key, 7)

    def linear(kw, kb, fan_in, fan_out):
        bound = 1.0 / jnp.sqrt(fan_in)
        w = jax.random.uniform(kw, (fan_in, fan_out), jnp.float32, -bound, bound)
        b = jax.random.uniform(kb, (1, fan_out), jnp.float32, -bound, bound)
        return w, b

    w1, b1 = linear(ks[0], ks[1], feat_dim, 256)
    w2, b2 = linear(ks[2], ks[3], 256, 128)
    w3, b3 = linear(ks[4], ks[5], 128, n_env)
    class_env_probs = jax.random.normal(ks[6], (n_cls, n_env), jnp.float32)
    return dict(w1=w1, b1=b1, w2=w2, b2=b2, w3=w3, b3=b3,
                class_env_probs=class_env_probs)


def reference_forward(features, labels, params):
    """Pure-JAX f32 reference for correctness check."""
    h1 = jnp.maximum(features @ params["w1"] + params["b1"], 0.0)
    h2 = jnp.maximum(h1 @ params["w2"] + params["b2"], 0.0)
    logits = h2 @ params["w3"] + params["b3"]
    sample_split = jax.nn.softmax(logits, axis=-1)
    class_split = jax.nn.softmax(params["class_env_probs"][labels], axis=-1)
    return sample_split, class_split


if __name__ == "__main__":
    n_cls, n_env, feat_dim = 3, 4, 128
    B = 8

    key = jax.random.PRNGKey(0)
    k_feat, k_lab, k_par = jax.random.split(key, 3)

    features = jax.random.normal(k_feat, (B, feat_dim), jnp.float32)
    labels = jax.random.randint(k_lab, (B,), 0, n_cls, jnp.int32)
    params = init_params(k_par, n_cls, n_env, feat_dim)

    sample_split, class_split = partition_forward(features, labels, params)
    jax.block_until_ready((sample_split, class_split))

    # Host-side NaN guard (mirrors torch.isnan(...).any() check in the module).
    assert not bool(jnp.any(jnp.isnan(sample_split))), "NaN in env logits/softmax"

    ref_sample, ref_class = reference_forward(features, labels, params)
    # sample_split uses bf16 MXU operands -> compare against f32 reference with
    # bf16-level tolerance; class_split path is exact f32 (one-hot gather).
    assert jnp.allclose(sample_split, ref_sample, atol=2e-2, rtol=2e-2)
    assert jnp.allclose(class_split, ref_class, atol=1e-4, rtol=1e-4)
    assert sample_split.shape == (B, n_env) and class_split.shape == (B, n_env)
    # Rows of each softmax sum to ~1.
    assert jnp.allclose(jnp.sum(sample_split, axis=-1), 1.0, atol=1e-3)
    assert jnp.allclose(jnp.sum(class_split, axis=-1), 1.0, atol=1e-3)

    print("KERNEL_OK")
</pallas_src>

<mosaic_0001>
module attributes {stable_mosaic.version = 11 : i64} {
  func.func @_partition_kernel(%arg0: i32, %arg1: memref<16x128xbf16, #tpu.memory_space<vmem>>, %arg2: memref<16x1xi32, #tpu.memory_space<vmem>>, %arg3: memref<128x256xbf16, #tpu.memory_space<vmem>>, %arg4: memref<1x256xf32, #tpu.memory_space<vmem>>, %arg5: memref<256x128xbf16, #tpu.memory_space<vmem>>, %arg6: memref<1x128xf32, #tpu.memory_space<vmem>>, %arg7: memref<128x4xbf16, #tpu.memory_space<vmem>>, %arg8: memref<1x4xf32, #tpu.memory_space<vmem>>, %arg9: memref<8x4xf32, #tpu.memory_space<vmem>>, %arg10: memref<16x8xf32, #tpu.memory_space<vmem>>) attributes {dimension_semantics = [#tpu.dimension_semantics<parallel>], iteration_bounds = array<i64: 1>, scalar_prefetch = 0 : i64, scratch_operands = 0 : i64, tpu.core_type = #tpu.core_type<tc>, window_params = [{transform_indices = @transform_0, window_bounds = array<i64: 16, 128>}, {transform_indices = @transform_1, window_bounds = array<i64: 16, 1>}, {pipeline_mode = #tpu.pipeline_mode<synchronous>, transform_indices = @transform_2, window_bounds = array<i64: 128, 256>}, {pipeline_mode = #tpu.pipeline_mode<synchronous>, transform_indices = @transform_3, window_bounds = array<i64: 1, 256>}, {pipeline_mode = #tpu.pipeline_mode<synchronous>, transform_indices = @transform_4, window_bounds = array<i64: 256, 128>}, {pipeline_mode = #tpu.pipeline_mode<synchronous>, transform_indices = @transform_5, window_bounds = array<i64: 1, 128>}, {pipeline_mode = #tpu.pipeline_mode<synchronous>, transform_indices = @transform_6, window_bounds = array<i64: 128, 4>}, {pipeline_mode = #tpu.pipeline_mode<synchronous>, transform_indices = @transform_7, window_bounds = array<i64: 1, 4>}, {pipeline_mode = #tpu.pipeline_mode<synchronous>, transform_indices = @transform_8, window_bounds = array<i64: 8, 4>}, {transform_indices = @transform_9, window_bounds = array<i64: 16, 8>}]} {
    %c0 = arith.constant 0 : index
    %c0_0 = arith.constant 0 : index
    %0 = vector.load %arg1[%c0, %c0_0] : memref<16x128xbf16, #tpu.memory_space<vmem>>, vector<16x128xbf16>
    %c0_1 = arith.constant 0 : index
    %c0_2 = arith.constant 0 : index
    %1 = vector.load %arg3[%c0_1, %c0_2] : memref<128x256xbf16, #tpu.memory_space<vmem>>, vector<128x256xbf16>
    %cst = arith.constant dense<0.000000e+00> : vector<16x256xf32>
    %2 = tpu.matmul %0, %1, %cst {dimension_numbers = #tpu.dot_dimension_numbers<[1], [0], [0], [1], [0, 0, 1, 1], [], []>} : vector<16x128xbf16>, vector<128x256xbf16>, vector<16x256xf32> -> vector<16x256xf32>
    %c0_3 = arith.constant 0 : index
    %c0_4 = arith.constant 0 : index
    %3 = vector.load %arg4[%c0_3, %c0_4] : memref<1x256xf32, #tpu.memory_space<vmem>>, vector<1x256xf32>
    %4 = vector.broadcast %3 : vector<1x256xf32> to vector<16x256xf32>
    %5 = arith.addf %2, %4 : vector<16x256xf32>
    %cst_5 = arith.constant 0.000000e+00 : f32
    %6 = vector.broadcast %cst_5 : f32 to vector<16x256xf32>
    %7 = arith.maximumf %5, %6 : vector<16x256xf32>
    %8 = arith.truncf %7 : vector<16x256xf32> to vector<16x256xbf16>
    %c0_6 = arith.constant 0 : index
    %c0_7 = arith.constant 0 : index
    %9 = vector.load %arg5[%c0_6, %c0_7] : memref<256x128xbf16, #tpu.memory_space<vmem>>, vector<256x128xbf16>
    %cst_8 = arith.constant dense<0.000000e+00> : vector<16x128xf32>
    %10 = tpu.matmul %8, %9, %cst_8 {dimension_numbers = #tpu.dot_dimension_numbers<[1], [0], [0], [1], [0, 0, 1, 1], [], []>} : vector<16x256xbf16>, vector<256x128xbf16>, vector<16x128xf32> -> vector<16x128xf32>
    %c0_9 = arith.constant 0 : index
    %c0_10 = arith.constant 0 : index
    %11 = vector.load %arg6[%c0_9, %c0_10] : memref<1x128xf32, #tpu.memory_space<vmem>>, vector<1x128xf32>
    %12 = vector.broadcast %11 : vector<1x128xf32> to vector<16x128xf32>
    %13 = arith.addf %10, %12 : vector<16x128xf32>
    %cst_11 = arith.constant 0.000000e+00 : f32
    %14 = vector.broadcast %cst_11 : f32 to vector<16x128xf32>
    %15 = arith.maximumf %13, %14 : vector<16x128xf32>
    %16 = arith.truncf %15 : vector<16x128xf32> to vector<16x128xbf16>
    %c0_12 = arith.constant 0 : index
    %c0_13 = arith.constant 0 : index
    %17 = vector.load %arg7[%c0_12, %c0_13] : memref<128x4xbf16, #tpu.memory_space<vmem>>, vector<128x4xbf16>
    %cst_14 = arith.constant dense<0.000000e+00> : vector<16x4xf32>
    %18 = tpu.matmul %16, %17, %cst_14 {dimension_numbers = #tpu.dot_dimension_numbers<[1], [0], [0], [1], [0, 0, 1, 1], [], []>} : vector<16x128xbf16>, vector<128x4xbf16>, vector<16x4xf32> -> vector<16x4xf32>
    %c0_15 = arith.constant 0 : index
    %c0_16 = arith.constant 0 : index
    %19 = vector.load %arg8[%c0_15, %c0_16] : memref<1x4xf32, #tpu.memory_space<vmem>>, vector<1x4xf32>
    %20 = vector.broadcast %19 : vector<1x4xf32> to vector<16x4xf32>
    %21 = arith.addf %18, %20 : vector<16x4xf32>
    %cst_17 = arith.constant dense<0xFF800000> : vector<16xf32>
    %22 = vector.multi_reduction <maximumf>, %21, %cst_17 [1] : vector<16x4xf32> to vector<16xf32>
    %23 = vector.shape_cast %22 : vector<16xf32> to vector<16x1xf32>
    %24 = vector.broadcast %23 : vector<16x1xf32> to vector<16x4xf32>
    %25 = arith.subf %21, %24 : vector<16x4xf32>
    %26 = math.exp %25 : vector<16x4xf32>
    %cst_18 = arith.constant dense<0.000000e+00> : vector<16xf32>
    %27 = vector.multi_reduction <add>, %26, %cst_18 [1] : vector<16x4xf32> to vector<16xf32>
    %28 = vector.shape_cast %27 : vector<16xf32> to vector<16x1xf32>
    %29 = tpu.reciprocal %28 {approx = true} : vector<16x1xf32> -> vector<16x1xf32>
    %30 = arith.mulf %28, %29 : vector<16x1xf32>
    %cst_19 = arith.constant 2.000000e+00 : f32
    %31 = vector.broadcast %cst_19 : f32 to vector<16x1xf32>
    %32 = arith.subf %31, %30 : vector<16x1xf32>
    %33 = arith.mulf %29, %32 : vector<16x1xf32>
    %34 = vector.broadcast %33 : vector<16x1xf32> to vector<16x4xf32>
    %35 = arith.mulf %26, %34 : vector<16x4xf32>
    %c0_20 = arith.constant 0 : index
    %c0_21 = arith.constant 0 : index
    %36 = vector.load %arg9[%c0_20, %c0_21] : memref<8x4xf32, #tpu.memory_space<vmem>>, vector<8x4xf32>
    %c0_22 = arith.constant 0 : index
    %c0_23 = arith.constant 0 : index
    %37 = vector.load %arg2[%c0_22, %c0_23] : memref<16x1xi32, #tpu.memory_space<vmem>>, vector<16x1xi32>
    %38 = tpu.iota {dimensions = array<i32: 1>} : vector<16x8xi32>
    %39 = vector.broadcast %37 : vector<16x1xi32> to vector<16x8xi32>
    %40 = arith.cmpi eq, %39, %38 : vector<16x8xi32>
    %41 = arith.extui %40 : vector<16x8xi1> to vector<16x8xi32>
    %42 = arith.sitofp %41 : vector<16x8xi32> to vector<16x8xf32>
    %cst_24 = arith.constant dense<0.000000e+00> : vector<16x4xf32>
    %43 = tpu.matmul %42, %36, %cst_24 {dimension_numbers = #tpu.dot_dimension_numbers<[1], [0], [0], [1], [0, 0, 1, 1], [], []>} : vector<16x8xf32>, vector<8x4xf32>, vector<16x4xf32> -> vector<16x4xf32>
    %cst_25 = arith.constant dense<0xFF800000> : vector<16xf32>
    %44 = vector.multi_reduction <maximumf>, %43, %cst_25 [1] : vector<16x4xf32> to vector<16xf32>
    %45 = vector.shape_cast %44 : vector<16xf32> to vector<16x1xf32>
    %46 = vector.broadcast %45 : vector<16x1xf32> to vector<16x4xf32>
    %47 = arith.subf %43, %46 : vector<16x4xf32>
    %48 = math.exp %47 : vector<16x4xf32>
    %cst_26 = arith.constant dense<0.000000e+00> : vector<16xf32>
    %49 = vector.multi_reduction <add>, %48, %cst_26 [1] : vector<16x4xf32> to vector<16xf32>
    %50 = vector.shape_cast %49 : vector<16xf32> to vector<16x1xf32>
    %51 = tpu.reciprocal %50 {approx = true} : vector<16x1xf32> -> vector<16x1xf32>
    %52 = arith.mulf %50, %51 : vector<16x1xf32>
    %cst_27 = arith.constant 2.000000e+00 : f32
    %53 = vector.broadcast %cst_27 : f32 to vector<16x1xf32>
    %54 = arith.subf %53, %52 : vector<16x1xf32>
    %55 = arith.mulf %51, %54 : vector<16x1xf32>
    %56 = vector.broadcast %55 : vector<16x1xf32> to vector<16x4xf32>
    %57 = arith.mulf %48, %56 : vector<16x4xf32>
    %58 = tpu.concatenate %35, %57 in 1 : vector<16x4xf32>, vector<16x4xf32> -> vector<16x8xf32>
    %c0_28 = arith.constant 0 : index
    %c0_29 = arith.constant 0 : index
    %59 = vector.load %arg10[%c0_28, %c0_29] : memref<16x8xf32, #tpu.memory_space<vmem>>, vector<16x8xf32>
    tpu.vector_store %arg10[%c0_28, %c0_29], %58 {strides = array<i32>} : memref<16x8xf32, #tpu.memory_space<vmem>>, vector<16x8xf32>,
    return
  }
  func.func @transform_0(%arg0: i32) -> (i32, i32) {
    %c0_i32 = arith.constant 0 : i32
    %c0_i32_0 = arith.constant 0 : i32
    return %arg0, %c0_i32 : i32, i32
  }
  func.func @transform_1(%arg0: i32) -> (i32, i32) {
    %c0_i32 = arith.constant 0 : i32
    %c0_i32_0 = arith.constant 0 : i32
    return %arg0, %c0_i32 : i32, i32
  }
  func.func @transform_2(%arg0: i32) -> (i32, i32) {
    %c0_i32 = arith.constant 0 : i32
    %c0_i32_0 = arith.constant 0 : i32
    %c0_i32_1 = arith.constant 0 : i32
    return %c0_i32, %c0_i32_0 : i32, i32
  }
  func.func @transform_3(%arg0: i32) -> (i32, i32) {
    %c0_i32 = arith.constant 0 : i32
    %c0_i32_0 = arith.constant 0 : i32
    %c0_i32_1 = arith.constant 0 : i32
    return %c0_i32, %c0_i32_0 : i32, i32
  }
  func.func @transform_4(%arg0: i32) -> (i32, i32) {
    %c0_i32 = arith.constant 0 : i32
    %c0_i32_0 = arith.constant 0 : i32
    %c0_i32_1 = arith.constant 0 : i32
    return %c0_i32, %c0_i32_0 : i32, i32
  }
  func.func @transform_5(%arg0: i32) -> (i32, i32) {
    %c0_i32 = arith.constant 0 : i32
    %c0_i32_0 = arith.constant 0 : i32
    %c0_i32_1 = arith.constant 0 : i32
    return %c0_i32, %c0_i32_0 : i32, i32
  }
  func.func @transform_6(%arg0: i32) -> (i32, i32) {
    %c0_i32 = arith.constant 0 : i32
    %c0_i32_0 = arith.constant 0 : i32
    %c0_i32_1 = arith.constant 0 : i32
    return %c0_i32, %c0_i32_0 : i32, i32
  }
  func.func @transform_7(%arg0: i32) -> (i32, i32) {
    %c0_i32 = arith.constant 0 : i32
    %c0_i32_0 = arith.constant 0 : i32
    %c0_i32_1 = arith.constant 0 : i32
    return %c0_i32, %c0_i32_0 : i32, i32
  }
  func.func @transform_8(%arg0: i32) -> (i32, i32) {
    %c0_i32 = arith.constant 0 : i32
    %c0_i32_0 = arith.constant 0 : i32
    %c0_i32_1 = arith.constant 0 : i32
    return %c0_i32, %c0_i32_0 : i32, i32
  }
  func.func @transform_9(%arg0: i32) -> (i32, i32) {
    %c0_i32 = arith.constant 0 : i32
    %c0_i32_0 = arith.constant 0 : i32
    return %arg0, %c0_i32 : i32, i32
  }
}

</mosaic_0001>

<llo_original>
// kernel: partition_forward.1
$region0: #{partition_forward.1}
  #allocation0 [shape = 'u32[]', space=smem, size = 0x4, offset = 0x4, fixed_abs, tag = 'smem constant byte address 0x4 - core index']
  #allocation1 [shape = 'u32[72,128]{1,0:T(1,128)}', space=vmem, size = 0x9000, scoped, tag = 'internal scratch']
  %s0 = inlined_call_operand.vmem [shape: bf16[16,128], index: 0, kind: input, shape index: {}]
  %s1 = inlined_call_operand.vmem [shape: s32[16,1], index: 1, kind: input, shape index: {}]
  %s2 = inlined_call_operand.vmem [shape: bf16[128,256], index: 2, kind: input, shape index: {}]
  %s3 = inlined_call_operand.vmem [shape: f32[1,256], index: 3, kind: input, shape index: {}]
  %s4 = inlined_call_operand.vmem [shape: bf16[256,128], index: 4, kind: input, shape index: {}]
  %s5 = inlined_call_operand.vmem [shape: f32[1,128], index: 5, kind: input, shape index: {}]
  %s6 = inlined_call_operand.vmem [shape: bf16[128,4], index: 6, kind: input, shape index: {}]
  %s7 = inlined_call_operand.vmem [shape: f32[1,4], index: 7, kind: input, shape index: {}]
  %s8 = inlined_call_operand.vmem [shape: f32[8,4], index: 8, kind: input, shape index: {}]
  %s9 = inlined_call_operand.vmem [shape: f32[16,8], index: 9, kind: output, shape index: {}]
  %s10 = sld [smem:[#allocation0]]
  $region46: #{partition_forward.1} parent=0
    _
  %s12 = ssub.s32 1, %s10
  %s13 = scalar_select 0, %s12, %s10
  // Predicated region
  $region2: #{partition_forward.1} parent=0 // pred_check
    _
  $region3: #{partition_forward.1} parent=0 // pred_check_branch
    %15 = sbr.rel (0) target = $region5
  $region4: #{partition_forward.1} parent=0 // pred_region
    _
  $region5: #{partition_forward.1} parent=0 // pred_fallthru
    _
  // Predicated region
  $region6: #{partition_forward.1} parent=0 // pred_check
    _
  $region7: #{partition_forward.1} parent=0 // pred_check_branch
    %17 = sbr.rel (0) target = $region9
  $region8: #{partition_forward.1} parent=0 // pred_region
    _
  $region9: #{partition_forward.1} parent=0 // pred_fallthru
    _
  // Predicated region
  $region10: #{partition_forward.1} parent=0 // pred_check
    _
  $region11: #{partition_forward.1} parent=0 // pred_check_branch
    %19 = sbr.rel (0) target = $region13
  $region12: #{partition_forward.1} parent=0 // pred_region
    _
  $region13: #{partition_forward.1} parent=0 // pred_fallthru
    _
  // Predicated region
  $region14: #{partition_forward.1} parent=0 // pred_check
    _
  $region15: #{partition_forward.1} parent=0 // pred_check_branch
    %21 = sbr.rel (0) target = $region17
  $region16: #{partition_forward.1} parent=0 // pred_region
    _
  $region17: #{partition_forward.1} parent=0 // pred_fallthru
    _
  // Predicated region
  $region18: #{partition_forward.1} parent=0 // pred_check
    _
  $region19: #{partition_forward.1} parent=0 // pred_check_branch
    %23 = sbr.rel (0) target = $region21
  $region20: #{partition_forward.1} parent=0 // pred_region
    _
  $region21: #{partition_forward.1} parent=0 // pred_fallthru
    _
  // Predicated region
  $region22: #{partition_forward.1} parent=0 // pred_check
    _
  $region23: #{partition_forward.1} parent=0 // pred_check_branch
    %25 = sbr.rel (0) target = $region25
  $region24: #{partition_forward.1} parent=0 // pred_region
    _
  $region25: #{partition_forward.1} parent=0 // pred_fallthru
    _
  // Predicated region
  $region26: #{partition_forward.1} parent=0 // pred_check
    _
  $region27: #{partition_forward.1} parent=0 // pred_check_branch
    %27 = sbr.rel (0) target = $region29
  $region28: #{partition_forward.1} parent=0 // pred_region
    _
  $region29: #{partition_forward.1} parent=0 // pred_fallthru
    _
  // Predicated region
  $region30: #{partition_forward.1} parent=0 // pred_check
    _
  $region31: #{partition_forward.1} parent=0 // pred_check_branch
    %29 = sbr.rel (0) target = $region33
  $region32: #{partition_forward.1} parent=0 // pred_region
    _
  $region33: #{partition_forward.1} parent=0 // pred_fallthru
    _
  // Predicated region
  $region34: #{partition_forward.1} parent=0 // pred_check
    _
  $region35: #{partition_forward.1} parent=0 // pred_check_branch
    %31 = sbr.rel (0) target = $region37
  $region36: #{partition_forward.1} parent=0 // pred_region
    _
  $region37: #{partition_forward.1} parent=0 // pred_fallthru
    _
  %v32 = vld [vmem:[%s0] sm:$0xf]
  %v33 = vld [vmem:[%s0 + $0x4] sm:$0xf]
  %v34 = vld [vmem:[%s2] sm:$0xff]
  %v35 = vld [vmem:[%s2 + $0x8] sm:$0xff]
  %v36 = vld [vmem:[%s2 + $0x10] sm:$0xff]
  %v37 = vld [vmem:[%s2 + $0x18] sm:$0xff]
  %v38 = vld [vmem:[%s2 + $0x20] sm:$0xff]
  %v39 = vld [vmem:[%s2 + $0x28] sm:$0xff]
  %v40 = vld [vmem:[%s2 + $0x30] sm:$0xff]
  %v41 = vld [vmem:[%s2 + $0x38] sm:$0xff]
  %v42 = vld [vmem:[%s2 + $0x40] sm:$0xff]
  %v43 = vld [vmem:[%s2 + $0x48] sm:$0xff]
  %v44 = vld [vmem:[%s2 + $0x50] sm:$0xff]
  %v45 = vld [vmem:[%s2 + $0x58] sm:$0xff]
  %v46 = vld [vmem:[%s2 + $0x60] sm:$0xff]
  %v47 = vld [vmem:[%s2 + $0x68] sm:$0xff]
  %v48 = vld [vmem:[%s2 + $0x70] sm:$0xff]
  %v49 = vld [vmem:[%s2 + $0x78] sm:$0xff]
  %v50 = vld [vmem:[%s3] sm:$0x3]
  %v52 = vperm.slane %v50, 0
  %v53 = vperm.slane %v50, 1
  %v58 = vunpack.c.l.b16 %v32
  %v59 = vunpack.c.l.b16 %v33
  %v60 = vpack.c.b16 %v59, %v58
  %v78 = vunpack.c.l.b16 %v34
  %v79 = vunpack.c.h.b16 %v34
  %v80 = vunpack.c.l.b16 %v35
  %v81 = vunpack.c.h.b16 %v35
  %v82 = vunpack.c.l.b16 %v36
  %v83 = vunpack.c.h.b16 %v36
  %v84 = vunpack.c.l.b16 %v37
  %v85 = vunpack.c.h.b16 %v37
  %v86 = vunpack.c.l.b16 %v38
  %v87 = vunpack.c.h.b16 %v38
  %v88 = vunpack.c.l.b16 %v39
  %v89 = vunpack.c.h.b16 %v39
  %v90 = vunpack.c.l.b16 %v40
  %v91 = vunpack.c.h.b16 %v40
  %v92 = vunpack.c.l.b16 %v41
  %v93 = vunpack.c.h.b16 %v41
  %v94 = vunpack.c.l.b16 %v42
  %v95 = vunpack.c.h.b16 %v42
  %v96 = vunpack.c.l.b16 %v43
  %v97 = vunpack.c.h.b16 %v43
  %v98 = vunpack.c.l.b16 %v44
  %v99 = vunpack.c.h.b16 %v44
  %v100 = vunpack.c.l.b16 %v45
  %v101 = vunpack.c.h.b16 %v45
  %v102 = vunpack.c.l.b16 %v46
  %v103 = vunpack.c.h.b16 %v46
  %v104 = vunpack.c.l.b16 %v47
  %v105 = vunpack.c.h.b16 %v47
  %v106 = vunpack.c.l.b16 %v48
  %v107 = vunpack.c.h.b16 %v48
  %v108 = vunpack.c.l.b16 %v49
  %v109 = vunpack.c.h.b16 %v49
  %v110 = vpack.c.b16 %v80, %v78
  %v111 = vpack.c.b16 %v81, %v79
  %v112 = vpack.c.b16 %v84, %v82
  %v113 = vpack.c.b16 %v85, %v83
  %v114 = vpack.c.b16 %v88, %v86
  %v115 = vpack.c.b16 %v89, %v87
  %v116 = vpack.c.b16 %v92, %v90
  %v117 = vpack.c.b16 %v93, %v91
  %v118 = vpack.c.b16 %v96, %v94
  %v119 = vpack.c.b16 %v97, %v95
  %v120 = vpack.c.b16 %v100, %v98
  %v121 = vpack.c.b16 %v101, %v99
  %v122 = vpack.c.b16 %v104, %v102
  %v123 = vpack.c.b16 %v105, %v103
  %v124 = vpack.c.b16 %v108, %v106
  %v125 = vpack.c.b16 %v109, %v107
  %142 = vmatpush.bf16.msra.mxu0 %v124
  %143 = vmatpush.bf16.msra.mxu0 %v122
  %144 = vmatpush.bf16.msra.mxu0 %v120
  %145 = vmatpush.bf16.msra.mxu0 %v118
  %146 = vmatpush.bf16.msra.mxu0 %v116
  %147 = vmatpush.bf16.msra.mxu0 %v114
  %148 = vmatpush.bf16.msra.mxu0 %v112
  %149 = vmatpush.bf16.msra.mxu0 %v110
  %150 = vmatmul.bf16.gmra.mxu0 %v60
  %v151 = vpop.f32.mrf.mxu0
  %v152 = vadd.f32 %v52, %v151
  %v153 = vpop.f32.mrf.mxu0
  %v154 = vadd.f32 %v52, %v153
  %155 = vdwg.mxu0
  %156 = vmatpush.bf16.msra.mxu0 %v125
  %157 = vmatpush.bf16.msra.mxu0 %v123
  %158 = vmatpush.bf16.msra.mxu0 %v121
  %159 = vmatpush.bf16.msra.mxu0 %v119
  %160 = vmatpush.bf16.msra.mxu0 %v117
  %161 = vmatpush.bf16.msra.mxu0 %v115
  %162 = vmatpush.bf16.msra.mxu0 %v113
  %163 = vmatpush.bf16.msra.mxu0 %v111
  %164 = vmatmul.bf16.gmra.mxu0 %v60
  %v165 = vpop.f32.mrf.mxu0
  %v166 = vadd.f32 %v53, %v165
  %v167 = vpop.f32.mrf.mxu0
  %v168 = vadd.f32 %v53, %v167
  %169 = vdwg.mxu0
  %v170 = vmax.f32 %v152, 0.0
  %v171 = vmax.f32 %v166, 0.0
  %v172 = vmax.f32 %v154, 0.0
  %v173 = vmax.f32 %v168, 0.0
  %v174 = vpack.c.bf16 %v172, %v170
  %v175 = vpack.c.bf16 %v173, %v171
  %v176 = vld [vmem:[%s4] sm:$0xf]
  %v177 = vld [vmem:[%s4 + $0x4] sm:$0xf]
  %v178 = vld [vmem:[%s4 + $0x8] sm:$0xf]
  %v179 = vld [vmem:[%s4 + $0xc] sm:$0xf]
  %v180 = vld [vmem:[%s4 + $0x10] sm:$0xf]
  %v181 = vld [vmem:[%s4 + $0x14] sm:$0xf]
  %v182 = vld [vmem:[%s4 + $0x18] sm:$0xf]
  %v183 = vld [vmem:[%s4 + $0x1c] sm:$0xf]
  %v184 = vld [vmem:[%s4 + $0x20] sm:$0xf]
  %v185 = vld [vmem:[%s4 + $0x24] sm:$0xf]
  %v186 = vld [vmem:[%s4 + $0x28] sm:$0xf]
  %v187 = vld [vmem:[%s4 + $0x2c] sm:$0xf]
  %v188 = vld [vmem:[%s4 + $0x30] sm:$0xf]
  %v189 = vld [vmem:[%s4 + $0x34] sm:$0xf]
  %v190 = vld [vmem:[%s4 + $0x38] sm:$0xf]
  %v191 = vld [vmem:[%s4 + $0x3c] sm:$0xf]
  %v192 = vld [vmem:[%s4 + $0x40] sm:$0xf]
  %v193 = vld [vmem:[%s4 + $0x44] sm:$0xf]
  %v194 = vld [vmem:[%s4 + $0x48] sm:$0xf]
  %v195 = vld [vmem:[%s4 + $0x4c] sm:$0xf]
  %v196 = vld [vmem:[%s4 + $0x50] sm:$0xf]
  %v197 = vld [vmem:[%s4 + $0x54] sm:$0xf]
  %v198 = vld [vmem:[%s4 + $0x58] sm:$0xf]
  %v199 = vld [vmem:[%s4 + $0x5c] sm:$0xf]
  %v200 = vld [vmem:[%s4 + $0x60] sm:$0xf]
  %v201 = vld [vmem:[%s4 + $0x64] sm:$0xf]
  %v202 = vld [vmem:[%s4 + $0x68] sm:$0xf]
  %v203 = vld [vmem:[%s4 + $0x6c] sm:$0xf]
  %v204 = vld [vmem:[%s4 + $0x70] sm:$0xf]
  %v205 = vld [vmem:[%s4 + $0x74] sm:$0xf]
  %v206 = vld [vmem:[%s4 + $0x78] sm:$0xf]
  %v207 = vld [vmem:[%s4 + $0x7c] sm:$0xf]
  %v208 = vld [vmem:[%s5] sm:$0x1]
  %v210 = vperm.slane %v208, 0
  %v244 = vunpack.c.l.b16 %v176
  %v245 = vunpack.c.l.b16 %v177
  %v246 = vunpack.c.l.b16 %v178
  %v247 = vunpack.c.l.b16 %v179
  %v248 = vunpack.c.l.b16 %v180
  %v249 = vunpack.c.l.b16 %v181
  %v250 = vunpack.c.l.b16 %v182
  %v251 = vunpack.c.l.b16 %v183
  %v252 = vunpack.c.l.b16 %v184
  %v253 = vunpack.c.l.b16 %v185
  %v254 = vunpack.c.l.b16 %v186
  %v255 = vunpack.c.l.b16 %v187
  %v256 = vunpack.c.l.b16 %v188
  %v257 = vunpack.c.l.b16 %v189
  %v258 = vunpack.c.l.b16 %v190
  %v259 = vunpack.c.l.b16 %v191
  %v260 = vunpack.c.l.b16 %v192
  %v261 = vunpack.c.l.b16 %v193
  %v262 = vunpack.c.l.b16 %v194
  %v263 = vunpack.c.l.b16 %v195
  %v264 = vunpack.c.l.b16 %v196
  %v265 = vunpack.c.l.b16 %v197
  %v266 = vunpack.c.l.b16 %v198
  %v267 = vunpack.c.l.b16 %v199
  %v268 = vunpack.c.l.b16 %v200
  %v269 = vunpack.c.l.b16 %v201
  %v270 = vunpack.c.l.b16 %v202
  %v271 = vunpack.c.l.b16 %v203
  %v272 = vunpack.c.l.b16 %v204
  %v273 = vunpack.c.l.b16 %v205
  %v274 = vunpack.c.l.b16 %v206
  %v275 = vunpack.c.l.b16 %v207
  %v276 = vpack.c.b16 %v245, %v244
  %v277 = vpack.c.b16 %v247, %v246
  %v278 = vpack.c.b16 %v249, %v248
  %v279 = vpack.c.b16 %v251, %v250
  %v280 = vpack.c.b16 %v253, %v252
  %v281 = vpack.c.b16 %v255, %v254
  %v282 = vpack.c.b16 %v257, %v256
  %v283 = vpack.c.b16 %v259, %v258
  %v284 = vpack.c.b16 %v261, %v260
  %v285 = vpack.c.b16 %v263, %v262
  %v286 = vpack.c.b16 %v265, %v264
  %v287 = vpack.c.b16 %v267, %v266
  %v288 = vpack.c.b16 %v269, %v268
  %v289 = vpack.c.b16 %v271, %v270
  %v290 = vpack.c.b16 %v273, %v272
  %v291 = vpack.c.b16 %v275, %v274
  %308 = vmatpush.bf16.msra.mxu0 %v283
  %309 = vmatpush.bf16.msra.mxu0 %v282
  %310 = vmatpush.bf16.msra.mxu0 %v281
  %311 = vmatpush.bf16.msra.mxu0 %v280
  %312 = vmatpush.bf16.msra.mxu0 %v279
  %313 = vmatpush.bf16.msra.mxu0 %v278
  %314 = vmatpush.bf16.msra.mxu0 %v277
  %315 = vmatpush.bf16.msra.mxu0 %v276
  %316 = vmatmul.bf16.gmra.mxu0 %v174
  %v317 = vpop.f32.mrf.mxu0
  %v318 = vadd.f32 %v210, %v317
  %v319 = vpop.f32.mrf.mxu0
  %v320 = vadd.f32 %v210, %v319
  %321 = vdwg.mxu0
  %322 = vmatpush.bf16.msra.mxu0 %v291
  %323 = vmatpush.bf16.msra.mxu0 %v290
  %324 = vmatpush.bf16.msra.mxu0 %v289
  %325 = vmatpush.bf16.msra.mxu0 %v288
  %326 = vmatpush.bf16.msra.mxu0 %v287
  %327 = vmatpush.bf16.msra.mxu0 %v286
  %328 = vmatpush.bf16.msra.mxu0 %v285
  %329 = vmatpush.bf16.msra.mxu0 %v284
  %330 = vmatmul.bf16.gmra.mxu0 %v175
  %v331 = vpop.f32.mrf.mxu0
  %v332 = vadd.f32 %v318, %v331
  %v333 = vpop.f32.mrf.mxu0
  %v334 = vadd.f32 %v320, %v333
  %335 = vdwg.mxu0
  %v336 = vmax.f32 %v332, 0.0
  %v337 = vmax.f32 %v334, 0.0
  %v338 = vpack.c.bf16 %v337, %v336
  %v339 = vld [vmem:[%s6] sm:$0xf]
  %v340 = vld [vmem:[%s6 + $0x4] sm:$0xf]
  %v341 = vld [vmem:[%s6 + $0x8] sm:$0xf]
  %v342 = vld [vmem:[%s6 + $0xc] sm:$0xf]
  %v343 = vld [vmem:[%s6 + $0x10] sm:$0xf]
  %v344 = vld [vmem:[%s6 + $0x14] sm:$0xf]
  %v345 = vld [vmem:[%s6 + $0x18] sm:$0xf]
  %v346 = vld [vmem:[%s6 + $0x1c] sm:$0xf]
  %v347 = vld [vmem:[%s6 + $0x20] sm:$0xf]
  %v348 = vld [vmem:[%s6 + $0x24] sm:$0xf]
  %v349 = vld [vmem:[%s6 + $0x28] sm:$0xf]
  %v350 = vld [vmem:[%s6 + $0x2c] sm:$0xf]
  %v351 = vld [vmem:[%s6 + $0x30] sm:$0xf]
  %v352 = vld [vmem:[%s6 + $0x34] sm:$0xf]
  %v353 = vld [vmem:[%s6 + $0x38] sm:$0xf]
  %v354 = vld [vmem:[%s6 + $0x3c] sm:$0xf]
  %v355 = vld [vmem:[%s7] sm:$0x1]
  %v357 = vperm.slane %v355, 0
  %v375 = vunpack.c.l.b16 %v339
  %v376 = vunpack.c.l.b16 %v340
  %v377 = vunpack.c.l.b16 %v341
  %v378 = vunpack.c.l.b16 %v342
  %v379 = vunpack.c.l.b16 %v343
  %v380 = vunpack.c.l.b16 %v344
  %v381 = vunpack.c.l.b16 %v345
  %v382 = vunpack.c.l.b16 %v346
  %v383 = vunpack.c.l.b16 %v347
  %v384 = vunpack.c.l.b16 %v348
  %v385 = vunpack.c.l.b16 %v349
  %v386 = vunpack.c.l.b16 %v350
  %v387 = vunpack.c.l.b16 %v351
  %v388 = vunpack.c.l.b16 %v352
  %v389 = vunpack.c.l.b16 %v353
  %v390 = vunpack.c.l.b16 %v354
  %v391 = vpack.c.b16 %v376, %v375
  %v392 = vpack.c.b16 %v378, %v377
  %v393 = vpack.c.b16 %v380, %v379
  %v394 = vpack.c.b16 %v382, %v381
  %v395 = vpack.c.b16 %v384, %v383
  %v396 = vpack.c.b16 %v386, %v385
  %v397 = vpack.c.b16 %v388, %v387
  %v398 = vpack.c.b16 %v390, %v389
  %407 = vmatpush.bf16.msra.mxu0 %v398
  %408 = vmatpush.bf16.msra.mxu0 %v397
  %409 = vmatpush.bf16.msra.mxu0 %v396
  %410 = vmatpush.bf16.msra.mxu0 %v395
  %411 = vmatpush.bf16.msra.mxu0 %v394
  %412 = vmatpush.bf16.msra.mxu0 %v393
  %413 = vmatpush.bf16.msra.mxu0 %v392
  %414 = vmatpush.bf16.msra.mxu0 %v391
  %415 = vmatmul.bf16.gmra.mxu0 %v338
  %v416 = vpop.f32.mrf.mxu0
  %v417 = vadd.f32 %v357, %v416
  %v418 = vpop.f32.mrf.mxu0
  %v419 = vadd.f32 %v357, %v418
  %420 = vdwg.mxu0
  %vm421 = vcmask 31744
  %v422 = vsel %vm421, %v417, -inf
  %423 = vmax.xlane.f32.xlu0 %v422
  %v424 = vpop.xlane.xlu0 %423
  %v425 = vsel %vm421, %v419, -inf
  %426 = vmax.xlane.f32.xlu0 %v425
  %v427 = vpop.xlane.xlu0 %426
  %v428 = vsub.f32 %v417, %v424
  %v429 = vsub.f32 %v419, %v427
  %v430 = vmul.f32 %v428, 1.442695
  %v431 = vpow.pop %v430
  %v432 = vmul.f32 %v429, 1.442695
  %v433 = vpow.pop %v432
  %v434 = vsel %vm421, %v431, 0.0
  %435 = vadd.xlane.f32.xlu0 %v434
  %v436 = vpop.xlane.xlu0 %435
  %v437 = vsel %vm421, %v433, 0.0
  %438 = vadd.xlane.f32.xlu0 %v437
  %v439 = vpop.xlane.xlu0 %438
  %v440 = vrcp.pop %v436
  %v441 = vrcp.pop %v439
  %v442 = vmul.f32 %v436, %v440
  %v443 = vmul.f32 %v439, %v441
  %v444 = vsub.f32 2.0, %v442
  %v445 = vsub.f32 2.0, %v443
  %v446 = vmul.f32 %v440, %v444
  %v447 = vmul.f32 %v441, %v445
  %v448 = vmul.f32 %v431, %v446
  %v449 = vmul.f32 %v433, %v447
  %v450 = vld [vmem:[%s8] sm:$0xff]
  %v451 = vld [vmem:[%s1] sm:$0xff]
  %v452 = vld [vmem:[%s1 + $0x8] sm:$0xff]
  %v453 = vlaneseq
  %v454 = vand.u32 %v453, 127
  %455 = vset.pattern.permute.xlu0 0
  %456 = vperm.xlu0 %455, %v451
  %v457 = vpop.permute.xlu0 %456
  %458 = vset.pattern.permute.xlu0 0
  %459 = vperm.xlu0 %458, %v452
  %v460 = vpop.permute.xlu0 %459
  %vm461 = vcmp.eq.s32.totalorder %v457, %v454
  %vm462 = vcmp.eq.s32.totalorder %v460, %v454
  %v463 = vsel %vm461, 1, 0
  %v464 = vsel %vm462, 1, 0
  %v465 = vcvt.s32.f32 %v463
  %v466 = vcvt.s32.f32 %v464
  %vm467 = vcmask 64512
  %v469 = vsel %vm467, %v465, 0
  %v472 = vsel %vm467, %v466, 0
  %474 = vmatpush.msra.mxu0 0.0
  %475 = vmatpush.msra.mxu0 0.0
  %476 = vmatpush.msra.mxu0 0.0
  %477 = vmatpush.msra.mxu0 0.0
  %478 = vmatpush.msra.mxu0 0.0
  %479 = vmatpush.msra.mxu0 0.0
  %480 = vmatpush.msra.mxu0 0.0
  %481 = vmatpush.msra.mxu0 0.0
  %482 = vmatpush.msra.mxu0 0.0
  %483 = vmatpush.msra.mxu0 0.0
  %484 = vmatpush.msra.mxu0 0.0
  %485 = vmatpush.msra.mxu0 0.0
  %486 = vmatpush.msra.mxu0 0.0
  %487 = vmatpush.msra.mxu0 0.0
  %488 = vmatpush.msra.mxu0 0.0
  %489 = vmatpush.msra.mxu0 %v450
  %490 = vmatmul.f32.gmra.mxu0 %v469
  %v491 = vpop.f32.mrf.mxu0
  %v492 = vadd.f32 0.0, %v491
  %493 = vmatmul.f32.gmra.mxu0 %v472
  %v494 = vpop.f32.mrf.mxu0
  %v495 = vadd.f32 0.0, %v494
  %496 = vdwg.mxu0
  %v497 = vsel %vm421, %v492, -inf
  %498 = vmax.xlane.f32.xlu0 %v497
  %v499 = vpop.xlane.xlu0 %498
  %v500 = vsel %vm421, %v495, -inf
  %501 = vmax.xlane.f32.xlu0 %v500
  %v502 = vpop.xlane.xlu0 %501
  %v503 = vsub.f32 %v492, %v499
  %v504 = vsub.f32 %v495, %v502
  %v505 = vmul.f32 %v503, 1.442695
  %v506 = vpow.pop %v505
  %v507 = vmul.f32 %v504, 1.442695
  %v508 = vpow.pop %v507
  %v509 = vsel %vm421, %v506, 0.0
  %510 = vadd.xlane.f32.xlu0 %v509
  %v511 = vpop.xlane.xlu0 %510
  %v512 = vsel %vm421, %v508, 0.0
  %513 = vadd.xlane.f32.xlu0 %v512
  %v514 = vpop.xlane.xlu0 %513
  %v515 = vrcp.pop %v511
  %v516 = vrcp.pop %v514
  %v517 = vmul.f32 %v511, %v515
  %v518 = vmul.f32 %v514, %v516
  %v519 = vsub.f32 2.0, %v517
  %v520 = vsub.f32 2.0, %v518
  %v521 = vmul.f32 %v515, %v519
  %v522 = vmul.f32 %v516, %v520
  %v523 = vmul.f32 %v506, %v521
  %v524 = vmul.f32 %v508, %v522
  %527 = vrot.lane.b32.xlu0 %v523, 4
  %v528 = vpop.permute.xlu0 %527
  %529 = vrot.lane.b32.xlu0 %v524, 4
  %v530 = vpop.permute.xlu0 %529
  %v533 = vsel %vm421, %v448, %v528
  %v534 = vsel %vm421, %v449, %v530
  %535 = vst.msk [vmem:[%s9] sm:$0xff] %vm467, %v533
  %536 = vst.msk [vmem:[%s9 + $0x8] sm:$0xff] %vm467, %v534
  // Predicated region
  $region38: #{partition_forward.1} parent=0 // pred_check
    _
  $region39: #{partition_forward.1} parent=0 // pred_check_branch
    %538 = sbr.rel (0) target = $region41
  $region40: #{partition_forward.1} parent=0 // pred_region
    _
  $region41: #{partition_forward.1} parent=0 // pred_fallthru
    _
  // Predicated region
  $region42: #{partition_forward.1} parent=0 // pred_check
    _
  $region43: #{partition_forward.1} parent=0 // pred_check_branch
    %540 = sbr.rel (0) target = $region45
  $region44: #{partition_forward.1} parent=0 // pred_region
    _
  $region45: #{partition_forward.1} parent=0 // pred_fallthru
    _

</llo_original>
